<compile_context>
chip_gen: v7x
topology: tpu7x:2x2x1
jax: 0.10.0
libtpu: 0.0.40
codegen_flags: <defaults>
</compile_context>

<pallas_src>
import math
import functools

import jax
import jax.numpy as jnp
from jax.experimental import pallas as pl
from jax.experimental.pallas import tpu as pltpu


SQRT_HALF = math.sqrt(0.5)


# ----------------------------------------------------------------------------
# Kernel
# ----------------------------------------------------------------------------
def _res_conv_glu_kernel(*refs, t_tile, K, dilation, pad, hidden, c_res,
                         compute_dtype):
    """One (batch, time-tile) block per grid step.

    refs (pad > 0):
      hl_ref  : (1, 1, pad, C_res)   left halo rows of this tile
      x_ref   : (1, Tt, C_res)       core tile (also the residual)
      hr_ref  : (1, 1, pad, C_res)   right halo rows
      aux_ref : (1, Tt, C_aux)
      wcat_ref: (K*C_res + C_aux, G) fused [dilated-conv taps | 1x1 aux] weight
      bc_ref  : (1, G)               conv bias (f32)
      wos_ref : (G//2, C_res+C_skip) fused [out | skip] weight
      bos_ref : (1, C_res+C_skip)    fused [out | skip] bias (f32)
      out_ref : (1, Tt, C_res)
      skip_ref: (1, Tt, C_skip)
    refs (pad == 0): same without hl_ref / hr_ref.
    """
    if pad > 0:
        (hl_ref, x_ref, hr_ref, aux_ref, wcat_ref, bc_ref, wos_ref, bos_ref,
         out_ref, skip_ref) = refs
    else:
        (x_ref, aux_ref, wcat_ref, bc_ref, wos_ref, bos_ref,
         out_ref, skip_ref) = refs

    x = x_ref[0]                                     # (Tt, C_res) io dtype
    xc = x.astype(compute_dtype)                     # cast BEFORE taps/concat
    aux = aux_ref[0].astype(compute_dtype)           # (Tt, C_aux)

    if pad > 0:
        xw = jnp.concatenate(
            [hl_ref[0, 0].astype(compute_dtype), xc,
             hr_ref[0, 0].astype(compute_dtype)], axis=0)   # (Tt+2*pad, C_res)
    else:
        xw = xc

    # im2col along lanes: K conv taps + the 1x1 aux conv fused into ONE deep
    # contraction (K*C_res + C_aux) on the MXU.
    taps = [xw[j * dilation: j * dilation + t_tile, :] for j in range(K)]
    x_cat = jnp.concatenate(taps + [aux], axis=-1)   # (Tt, K*C_res + C_aux)

    gate = jnp.dot(x_cat, wcat_ref[...],
                   preferred_element_type=jnp.float32) + bc_ref[...]  # (Tt, G)

    # GLU: tanh(first half) * sigmoid(second half)   (EUP path)
    h = jnp.tanh(gate[:, :hidden]) * jax.nn.sigmoid(gate[:, hidden:])

    # Fused out/skip projection: one wide matmul, lane-sliced afterwards.
    proj = jnp.dot(h.astype(compute_dtype), wos_ref[...],
                   preferred_element_type=jnp.float32) + bos_ref[...]

    out_ref[0] = ((proj[:, :c_res] + x.astype(jnp.float32))
                  * SQRT_HALF).astype(out_ref.dtype)
    skip_ref[0] = proj[:, c_res:].astype(skip_ref.dtype)


# ----------------------------------------------------------------------------
# Wrapper helpers
# ----------------------------------------------------------------------------
def _round_up(n, m):
    return -(-n // m) * m


def _pad_last(a, new):
    if a.shape[-1] == new:
        return a
    cfg = [(0, 0)] * (a.ndim - 1) + [(0, new - a.shape[-1])]
    return jnp.pad(a, cfg)


def _pad_gate(a, h, h_new):
    """Pad the gate (last) axis, keeping tanh half at [:h_new] and sigmoid
    half at [h_new:] so the in-kernel chunking stays aligned."""
    if h == h_new:
        return a
    return jnp.concatenate([_pad_last(a[..., :h], h_new),
                            _pad_last(a[..., h:], h_new)], axis=-1)


def _auto_vmem_limit(Tt, pad, K, Crp, Cap, Gp, Hp, Csp, io_bytes, cw_bytes):
    """Scoped-VMEM limit from actual block sizes (double-buffered) + temps.

    Stays at the 32 MiB scoped default for typical 512-row/128-channel tiles
    (safe on v7x's 64 MiB physical VMEM) and is capped at 96 MiB for big
    tiles on v5e/v6e (128 MiB physical)."""
    win = Tt + 2 * pad
    act = (win * Crp + Tt * Cap + Tt * (Crp + Csp)) * io_bytes
    wgt = ((K * Crp + Cap) * Gp + Gp + Hp * (Crp + Csp) + (Crp + Csp)) * cw_bytes
    tmp = ((win * Crp + Tt * (K * Crp + Cap)) * cw_bytes
           + Tt * (Gp + Hp + Crp + Csp) * 4)
    est = 2 * act + 2 * wgt + 2 * tmp
    return int(max(32 << 20, min(2 * est + (8 << 20), 96 << 20)))


# ----------------------------------------------------------------------------
# Primary (NTC) entry point
# ----------------------------------------------------------------------------
def res_conv_glu_ntc(x_ntc, aux_ntc, params, *, kernel_size, dilation=1,
                     t_tile=512, compute_dtype=jnp.float32,
                     channel_multiple=None, input_buffering=None,
                     vmem_limit_bytes=None):
    """ResConvGLU forward on NTC activations.

    x_ntc : (B, T, C_res), aux_ntc : (B, T, C_aux).  Outputs keep the input
    dtype; pass bf16 activations for stacked (memory-bound) layers — only the
    MXU accumulators and the epilogue run in f32.

    Tuning:
      * t_tile: 512-2048 on all generations (including v7x; per-block VMEM at
        realistic channels is a few MiB).  Must be a multiple of 8 (16 for
        bf16 activations) when T > t_tile.
      * channel_multiple=128 zero-pads channels for lane-dense stores and
        MXU-friendly contraction/N dims (exact; padded lanes carry zeros).
      * input_buffering=3 deepens the input pipeline (useful on v5e HBM).
    """
    if kernel_size % 2 == 0:
        raise ValueError("ResConvGLU Pallas kernel requires an odd kernel_size")

    B, T, C_res = x_ntc.shape
    C_aux = aux_ntc.shape[-1]
    K = kernel_size
    pad = (K - 1) // 2 * dilation
    io_dtype = x_ntc.dtype

    wc, bc = params["w_conv"], params["b_conv"]      # (K,C_res,G), (1,G)
    wa = params["w_aux"]                             # (C_aux, G)
    wo, bo = params["w_out"], params["b_out"]        # (H,C_res), (1,C_res)
    ws, bs = params["w_skip"], params["b_skip"]      # (H,C_skip), (1,C_skip)
    G = wc.shape[-1]
    H = G // 2
    C_skip = ws.shape[-1]

    # Optional zero-padding of channel dims to a lane multiple (exact).
    cm = channel_multiple or 1
    C_res_p = _round_up(C_res, cm)
    C_aux_p = _round_up(C_aux, cm)
    C_skip_p = _round_up(C_skip, cm)
    H_p = _round_up(H, cm)
    G_p = 2 * H_p

    wc = jnp.pad(_pad_gate(wc, H, H_p), ((0, 0), (0, C_res_p - C_res), (0, 0)))
    bc = _pad_gate(bc, H, H_p)
    wa = jnp.pad(_pad_gate(wa, H, H_p), ((0, C_aux_p - C_aux), (0, 0)))
    wo = jnp.pad(wo, ((0, H_p - H), (0, C_res_p - C_res)))
    bo = _pad_last(bo, C_res_p)
    ws = jnp.pad(ws, ((0, H_p - H), (0, C_skip_p - C_skip)))
    bs = _pad_last(bs, C_skip_p)

    # Fused weights/biases (tiny vs. activation traffic).
    w_cat = jnp.concatenate([wc.reshape(K * C_res_p, G_p), wa],
                            axis=0).astype(compute_dtype)   # (K*Cr+Ca, G)
    b_cat = bc.astype(jnp.float32)                           # (1, G)
    w_os = jnp.concatenate([wo, ws], axis=1).astype(compute_dtype)  # (H, Cr+Cs)
    b_os = jnp.concatenate([bo, bs], axis=1).astype(jnp.float32)

    # Time tiling (second-minor dim must stay sublane friendly).
    sub = 8 if jnp.dtype(io_dtype).itemsize >= 4 else 16
    if T <= t_tile:
        Tt = T
    else:
        if t_tile % sub:
            raise ValueError(
                f"t_tile must be a multiple of {sub} for dtype {io_dtype}")
        Tt = t_tile
    nT = pl.cdiv(T, Tt)
    T_round = nT * Tt

    # Core tiles: zero-pad time to a tile multiple / channels to the lane pad.
    x_core = x_ntc
    if T_round > T or C_res_p > C_res:
        x_core = jnp.pad(x_ntc, ((0, 0), (0, T_round - T), (0, C_res_p - C_res)))
    aux_core = aux_ntc
    if T_round > T or C_aux_p > C_aux:
        aux_core = jnp.pad(aux_ntc,
                           ((0, 0), (0, T_round - T), (0, C_aux_p - C_aux)))

    # Halo side-arrays: only 2*pad rows per tile are duplicated (vs. the whole
    # window previously), so the extra HBM traffic is ~2*pad/Tt of the input.
    has_halo = pad > 0
    if has_halo:
        if pad <= Tt:
            core_r = x_core.reshape(B, nT, Tt, C_res_p)
            zblk = jnp.zeros((B, 1, pad, C_res_p), io_dtype)
            halo_l = jnp.concatenate([zblk, core_r[:, :-1, Tt - pad:, :]], axis=1)
            halo_r = jnp.concatenate([core_r[:, 1:, :pad, :], zblk], axis=1)
        else:  # very large dilation relative to the tile: small gather
            x_p = jnp.pad(x_core, ((0, 0), (pad, pad), (0, 0)))
            idx = jnp.arange(nT)[:, None] * Tt + jnp.arange(pad)[None, :]
            halo_l = x_p[:, idx, :]
            halo_r = x_p[:, idx + Tt + pad, :]

    def bspec(shape, index_map):
        if input_buffering is None:
            return pl.BlockSpec(shape, index_map)
        return pl.BlockSpec(shape, index_map,
                            pipeline_mode=pl.Buffered(input_buffering))

    in_specs, inputs = [], []
    if has_halo:
        in_specs.append(bspec((1, 1, pad, C_res_p), lambda b, t: (b, t, 0, 0)))
        inputs.append(halo_l)
    in_specs.append(bspec((1, Tt, C_res_p), lambda b, t: (b, t, 0)))
    inputs.append(x_core)
    if has_halo:
        in_specs.append(bspec((1, 1, pad, C_res_p), lambda b, t: (b, t, 0, 0)))
        inputs.append(halo_r)
    in_specs.append(bspec((1, Tt, C_aux_p), lambda b, t: (b, t, 0)))
    inputs.append(aux_core)
    in_specs += [
        pl.BlockSpec((K * C_res_p + C_aux_p, G_p), lambda b, t: (0, 0)),
        pl.BlockSpec((1, G_p), lambda b, t: (0, 0)),
        pl.BlockSpec((H_p, C_res_p + C_skip_p), lambda b, t: (0, 0)),
        pl.BlockSpec((1, C_res_p + C_skip_p), lambda b, t: (0, 0)),
    ]
    inputs += [w_cat, b_cat, w_os, b_os]

    out_specs = [
        pl.BlockSpec((1, Tt, C_res_p), lambda b, t: (b, t, 0)),
        pl.BlockSpec((1, Tt, C_skip_p), lambda b, t: (b, t, 0)),
    ]

    if vmem_limit_bytes is None:
        vmem_limit_bytes = _auto_vmem_limit(
            Tt, pad, K, C_res_p, C_aux_p, G_p, H_p, C_skip_p,
            jnp.dtype(io_dtype).itemsize, jnp.dtype(compute_dtype).itemsize)

    kernel = functools.partial(
        _res_conv_glu_kernel, t_tile=Tt, K=K, dilation=dilation, pad=pad,
        hidden=H_p, c_res=C_res_p, compute_dtype=compute_dtype)

    outs, skips = pl.pallas_call(
        kernel,
        grid_spec=pltpu.PrefetchScalarGridSpec(
            num_scalar_prefetch=0,
            grid=(B, nT),
            in_specs=in_specs,
            out_specs=out_specs),
        out_shape=(jax.ShapeDtypeStruct((B, T_round, C_res_p), io_dtype),
                   jax.ShapeDtypeStruct((B, T_round, C_skip_p), io_dtype)),
        compiler_params=pltpu.CompilerParams(
            dimension_semantics=("parallel", "parallel"),
            vmem_limit_bytes=vmem_limit_bytes),
    )(*inputs)

    return outs[:, :T, :C_res], skips[:, :T, :C_skip]


# ----------------------------------------------------------------------------
# NCT convenience wrapper (matches the PyTorch module's layout)
# ----------------------------------------------------------------------------
def res_conv_glu(audios, auxs, params, **kwargs):
    """audios: (B, C_res, T), auxs: (B, C_aux, T)  (PyTorch NCT layout).

    Convenience wrapper around res_conv_glu_ntc; for stacked WaveNet layers
    keep activations NTC (and bf16) across layers and transpose once at the
    model boundary instead of per layer.
    Dropout with p=0.0 is the identity and is omitted.
    """
    outs, skips = res_conv_glu_ntc(jnp.transpose(audios, (0, 2, 1)),
                                   jnp.transpose(auxs, (0, 2, 1)),
                                   params, **kwargs)
    return jnp.transpose(outs, (0, 2, 1)), jnp.transpose(skips, (0, 2, 1))
    # TODO(synk): training-mode dropout (p > 0) would need in-kernel PRNG
    # (pltpu.prng_seed / stateful_bernoulli); the module uses p=0.0.


# ----------------------------------------------------------------------------
# Synthetic init + pure-JAX reference (verification)
# ----------------------------------------------------------------------------
def init_params(key, residual_channels, gate_channels, skip_channels,
                aux_channels, kernel_size):
    """Deterministic synthetic init (shapes follow the PyTorch module)."""
    ks = jax.random.split(key, 4)
    G = gate_channels

    def u(k, shape, scale):
        return jax.random.uniform(k, shape, jnp.float32, -scale, scale)

    # Conv1d: torch weight (G, C_res, K) -> stored as (K, C_res, G)
    w_conv = u(ks[0], (kernel_size, residual_channels, G),
               1.0 / math.sqrt(residual_channels * kernel_size))
    b_conv = jnp.zeros((1, G), jnp.float32)
    # Aux: torch (G, C_aux, 1) -> (C_aux, G), no bias
    w_aux = u(ks[1], (aux_channels, G), 1.0 / math.sqrt(aux_channels))
    # Out: torch (C_res, G//2, 1) -> (G//2, C_res)
    w_out = u(ks[2], (G // 2, residual_channels), 1.0 / math.sqrt(G // 2))
    b_out = jnp.zeros((1, residual_channels), jnp.float32)
    # Skip: torch (C_skip, G//2, 1) -> (G//2, C_skip)
    w_skip = u(ks[3], (G // 2, skip_channels), 1.0 / math.sqrt(G // 2))
    b_skip = jnp.zeros((1, skip_channels), jnp.float32)

    return dict(w_conv=w_conv, b_conv=b_conv, w_aux=w_aux,
                w_out=w_out, b_out=b_out, w_skip=w_skip, b_skip=b_skip)


def _reference(audios, auxs, params, *, kernel_size, dilation=1):
    """Pure-JAX reference of the PyTorch forward."""
    pad = (kernel_size - 1) // 2 * dilation
    w_conv_oik = jnp.transpose(params["w_conv"], (2, 1, 0))     # (G, C_res, K)
    gate = jax.lax.conv_general_dilated(
        audios, w_conv_oik, window_strides=(1,), padding=[(pad, pad)],
        rhs_dilation=(dilation,), dimension_numbers=("NCH", "OIH", "NCH"))
    gate = gate + params["b_conv"].reshape(1, -1, 1)
    gate = gate + jnp.einsum("bct,cg->bgt", auxs, params["w_aux"])
    G = gate.shape[1]
    h = jnp.tanh(gate[:, :G // 2]) * jax.nn.sigmoid(gate[:, G // 2:])
    outs = (jnp.einsum("bht,hc->bct", h, params["w_out"])
            + params["b_out"].reshape(1, -1, 1) + audios) * SQRT_HALF
    skips = (jnp.einsum("bht,hc->bct", h, params["w_skip"])
             + params["b_skip"].reshape(1, -1, 1))
    return outs, skips


# ----------------------------------------------------------------------------
if __name__ == "__main__":
    # Small shapes; T=32 with t_tile=16 exercises the (B, nT) grid and the
    # halo side-arrays; dilation=2 exercises a multi-row halo.
    B, C_res, C_gate, C_skip, C_aux, K, T = 2, 8, 16, 8, 4, 3, 32
    dilation = 2

    key = jax.random.PRNGKey(0)
    k_a, k_x, k_p = jax.random.split(key, 3)
    audios = jax.random.normal(k_a, (B, C_res, T), jnp.float32)   # NCT
    auxs = jax.random.normal(k_x, (B, C_aux, T), jnp.float32)     # NCT
    params = init_params(k_p, C_res, C_gate, C_skip, C_aux, K)

    ref_outs, ref_skips = _reference(audios, auxs, params,
                                     kernel_size=K, dilation=dilation)

    # 1) f32, NCT wrapper, multi-tile grid + halo path.
    outs, skips = res_conv_glu(audios, auxs, params, kernel_size=K,
                               dilation=dilation, t_tile=16)
    outs, skips = jax.block_until_ready((outs, skips))
    assert outs.shape == (B, C_res, T) and skips.shape == (B, C_skip, T)
    assert jnp.allclose(outs, ref_outs, atol=1e-5, rtol=1e-5)
    assert jnp.allclose(skips, ref_skips, atol=1e-5, rtol=1e-5)

    # 2) Lane-dense production layout: channels zero-padded to 128 (exact).
    outs_p, skips_p = res_conv_glu(audios, auxs, params, kernel_size=K,
                                   dilation=dilation, t_tile=16,
                                   channel_multiple=128)
    outs_p, skips_p = jax.block_until_ready((outs_p, skips_p))
    assert jnp.allclose(outs_p, ref_outs, atol=1e-5, rtol=1e-5)
    assert jnp.allclose(skips_p, ref_skips, atol=1e-5, rtol=1e-5)

    # 3) bf16 streamed activations + bf16 MXU operands through the NTC API.
    x_ntc16 = jnp.transpose(audios, (0, 2, 1)).astype(jnp.bfloat16)
    a_ntc16 = jnp.transpose(auxs, (0, 2, 1)).astype(jnp.bfloat16)
    o16, s16 = res_conv_glu_ntc(x_ntc16, a_ntc16, params, kernel_size=K,
                                dilation=dilation, t_tile=16,
                                compute_dtype=jnp.bfloat16)
    o16, s16 = jax.block_until_ready((o16, s16))
    assert o16.dtype == jnp.bfloat16 and s16.dtype == jnp.bfloat16
    o16_nct = jnp.transpose(o16.astype(jnp.float32), (0, 2, 1))
    s16_nct = jnp.transpose(s16.astype(jnp.float32), (0, 2, 1))
    assert jnp.allclose(o16_nct, ref_outs, atol=1e-1, rtol=1e-1)
    assert jnp.allclose(s16_nct, ref_skips, atol=1e-1, rtol=1e-1)

    # 4) kernel_size=1 (pad == 0, no halo arrays) path.
    params1 = init_params(k_p, C_res, C_gate, C_skip, C_aux, 1)
    ref1_o, ref1_s = _reference(audios, auxs, params1, kernel_size=1, dilation=1)
    o1, s1 = res_conv_glu(audios, auxs, params1, kernel_size=1, dilation=1,
                          t_tile=16)
    o1, s1 = jax.block_until_ready((o1, s1))
    assert jnp.allclose(o1, ref1_o, atol=1e-5, rtol=1e-5)
    assert jnp.allclose(s1, ref1_s, atol=1e-5, rtol=1e-5)

    print("KERNEL_OK")
</pallas_src>

<mosaic_0001>
module attributes {stable_mosaic.version = 11 : i64} {
  func.func @_res_conv_glu_kernel(%arg0: i32, %arg1: i32, %arg2: memref<1x1x2x8xf32, #tpu.memory_space<vmem>>, %arg3: memref<1x16x8xf32, #tpu.memory_space<vmem>>, %arg4: memref<1x1x2x8xf32, #tpu.memory_space<vmem>>, %arg5: memref<1x16x4xf32, #tpu.memory_space<vmem>>, %arg6: memref<28x16xf32, #tpu.memory_space<vmem>>, %arg7: memref<1x16xf32, #tpu.memory_space<vmem>>, %arg8: memref<8x16xf32, #tpu.memory_space<vmem>>, %arg9: memref<1x16xf32, #tpu.memory_space<vmem>>, %arg10: memref<1x16x8xf32, #tpu.memory_space<vmem>>, %arg11: memref<1x16x8xf32, #tpu.memory_space<vmem>>) attributes {dimension_semantics = [#tpu.dimension_semantics<parallel>, #tpu.dimension_semantics<parallel>], iteration_bounds = array<i64: 2, 2>, scalar_prefetch = 0 : i64, scratch_operands = 0 : i64, tpu.core_type = #tpu.core_type<tc>, window_params = [{transform_indices = @transform_0, window_bounds = array<i64: 1, 1, 2, 8>}, {transform_indices = @transform_1, window_bounds = array<i64: 1, 16, 8>}, {transform_indices = @transform_2, window_bounds = array<i64: 1, 1, 2, 8>}, {transform_indices = @transform_3, window_bounds = array<i64: 1, 16, 4>}, {pipeline_mode = #tpu.pipeline_mode<synchronous>, transform_indices = @transform_4, window_bounds = array<i64: 28, 16>}, {pipeline_mode = #tpu.pipeline_mode<synchronous>, transform_indices = @transform_5, window_bounds = array<i64: 1, 16>}, {pipeline_mode = #tpu.pipeline_mode<synchronous>, transform_indices = @transform_6, window_bounds = array<i64: 8, 16>}, {pipeline_mode = #tpu.pipeline_mode<synchronous>, transform_indices = @transform_7, window_bounds = array<i64: 1, 16>}, {transform_indices = @transform_8, window_bounds = array<i64: 1, 16, 8>}, {transform_indices = @transform_9, window_bounds = array<i64: 1, 16, 8>}]} {
    %c0 = arith.constant 0 : index
    %c0_0 = arith.constant 0 : index
    %c0_1 = arith.constant 0 : index
    %0 = vector.load %arg3[%c0, %c0_0, %c0_1] : memref<1x16x8xf32, #tpu.memory_space<vmem>>, vector<1x16x8xf32>
    %1 = vector.shape_cast %0 : vector<1x16x8xf32> to vector<16x8xf32>
    %c0_2 = arith.constant 0 : index
    %c0_3 = arith.constant 0 : index
    %c0_4 = arith.constant 0 : index
    %2 = vector.load %arg5[%c0_2, %c0_3, %c0_4] : memref<1x16x4xf32, #tpu.memory_space<vmem>>, vector<1x16x4xf32>
    %3 = vector.shape_cast %2 : vector<1x16x4xf32> to vector<16x4xf32>
    %c0_5 = arith.constant 0 : index
    %c0_6 = arith.constant 0 : index
    %c0_7 = arith.constant 0 : index
    %c0_8 = arith.constant 0 : index
    %4 = vector.load %arg2[%c0_5, %c0_6, %c0_7, %c0_8] : memref<1x1x2x8xf32, #tpu.memory_space<vmem>>, vector<1x1x2x8xf32>
    %5 = vector.shape_cast %4 : vector<1x1x2x8xf32> to vector<2x8xf32>
    %c0_9 = arith.constant 0 : index
    %c0_10 = arith.constant 0 : index
    %c0_11 = arith.constant 0 : index
    %c0_12 = arith.constant 0 : index
    %6 = vector.load %arg4[%c0_9, %c0_10, %c0_11, %c0_12] : memref<1x1x2x8xf32, #tpu.memory_space<vmem>>, vector<1x1x2x8xf32>
    %7 = vector.shape_cast %6 : vector<1x1x2x8xf32> to vector<2x8xf32>
    %8 = tpu.concatenate %5, %1, %7 in 0 : vector<2x8xf32>, vector<16x8xf32>, vector<2x8xf32> -> vector<20x8xf32>
    %9 = vector.extract_strided_slice %8 {offsets = [0, 0], sizes = [16, 8], strides = [1, 1]} : vector<20x8xf32> to vector<16x8xf32>
    %10 = vector.extract_strided_slice %8 {offsets = [2, 0], sizes = [16, 8], strides = [1, 1]} : vector<20x8xf32> to vector<16x8xf32>
    %11 = vector.extract_strided_slice %8 {offsets = [4, 0], sizes = [16, 8], strides = [1, 1]} : vector<20x8xf32> to vector<16x8xf32>
    %12 = tpu.concatenate %9, %10, %11, %3 in 1 : vector<16x8xf32>, vector<16x8xf32>, vector<16x8xf32>, vector<16x4xf32> -> vector<16x28xf32>
    %c0_13 = arith.constant 0 : index
    %c0_14 = arith.constant 0 : index
    %13 = vector.load %arg6[%c0_13, %c0_14] : memref<28x16xf32, #tpu.memory_space<vmem>>, vector<28x16xf32>
    %cst = arith.constant dense<0.000000e+00> : vector<16x16xf32>
    %14 = tpu.matmul %12, %13, %cst {dimension_numbers = #tpu.dot_dimension_numbers<[1], [0], [0], [1], [0, 0, 1, 1], [], []>} : vector<16x28xf32>, vector<28x16xf32>, vector<16x16xf32> -> vector<16x16xf32>
    %c0_15 = arith.constant 0 : index
    %c0_16 = arith.constant 0 : index
    %15 = vector.load %arg7[%c0_15, %c0_16] : memref<1x16xf32, #tpu.memory_space<vmem>>, vector<1x16xf32>
    %16 = vector.broadcast %15 : vector<1x16xf32> to vector<16x16xf32>
    %17 = arith.addf %14, %16 : vector<16x16xf32>
    %18 = vector.extract_strided_slice %17 {offsets = [0, 0], sizes = [16, 8], strides = [1, 1]} : vector<16x16xf32> to vector<16x8xf32>
    %19 = math.tanh %18 : vector<16x8xf32>
    %20 = vector.extract_strided_slice %17 {offsets = [0, 8], sizes = [16, 8], strides = [1, 1]} : vector<16x16xf32> to vector<16x8xf32>
    %21 = arith.negf %20 : vector<16x8xf32>
    %22 = math.exp %21 : vector<16x8xf32>
    %cst_17 = arith.constant 1.000000e+00 : f32
    %23 = vector.broadcast %cst_17 : f32 to vector<16x8xf32>
    %24 = arith.addf %23, %22 : vector<16x8xf32>
    %25 = arith.divf %23, %24 : vector<16x8xf32>
    %26 = arith.mulf %19, %25 : vector<16x8xf32>
    %c0_18 = arith.constant 0 : index
    %c0_19 = arith.constant 0 : index
    %27 = vector.load %arg8[%c0_18, %c0_19] : memref<8x16xf32, #tpu.memory_space<vmem>>, vector<8x16xf32>
    %cst_20 = arith.constant dense<0.000000e+00> : vector<16x16xf32>
    %28 = tpu.matmul %26, %27, %cst_20 {dimension_numbers = #tpu.dot_dimension_numbers<[1], [0], [0], [1], [0, 0, 1, 1], [], []>} : vector<16x8xf32>, vector<8x16xf32>, vector<16x16xf32> -> vector<16x16xf32>
    %c0_21 = arith.constant 0 : index
    %c0_22 = arith.constant 0 : index
    %29 = vector.load %arg9[%c0_21, %c0_22] : memref<1x16xf32, #tpu.memory_space<vmem>>, vector<1x16xf32>
    %30 = vector.broadcast %29 : vector<1x16xf32> to vector<16x16xf32>
    %31 = arith.addf %28, %30 : vector<16x16xf32>
    %32 = vector.extract_strided_slice %31 {offsets = [0, 0], sizes = [16, 8], strides = [1, 1]} : vector<16x16xf32> to vector<16x8xf32>
    %33 = arith.addf %32, %1 : vector<16x8xf32>
    %cst_23 = arith.constant 0.707106769 : f32
    %34 = vector.broadcast %cst_23 : f32 to vector<16x8xf32>
    %35 = arith.mulf %33, %34 : vector<16x8xf32>
    %c0_24 = arith.constant 0 : index
    %c0_25 = arith.constant 0 : index
    %c0_26 = arith.constant 0 : index
    %36 = vector.load %arg10[%c0_24, %c0_25, %c0_26] : memref<1x16x8xf32, #tpu.memory_space<vmem>>, vector<1x16x8xf32>
    %37 = vector.shape_cast %36 : vector<1x16x8xf32> to vector<16x8xf32>
    %38 = vector.shape_cast %35 : vector<16x8xf32> to vector<1x16x8xf32>
    tpu.vector_store %arg10[%c0_24, %c0_25, %c0_26], %38 {strides = array<i32>} : memref<1x16x8xf32, #tpu.memory_space<vmem>>, vector<1x16x8xf32>,
    %39 = vector.extract_strided_slice %31 {offsets = [0, 8], sizes = [16, 8], strides = [1, 1]} : vector<16x16xf32> to vector<16x8xf32>
    %c0_27 = arith.constant 0 : index
    %c0_28 = arith.constant 0 : index
    %c0_29 = arith.constant 0 : index
    %40 = vector.load %arg11[%c0_27, %c0_28, %c0_29] : memref<1x16x8xf32, #tpu.memory_space<vmem>>, vector<1x16x8xf32>
    %41 = vector.shape_cast %40 : vector<1x16x8xf32> to vector<16x8xf32>
    %42 = vector.shape_cast %39 : vector<16x8xf32> to vector<1x16x8xf32>
    tpu.vector_store %arg11[%c0_27, %c0_28, %c0_29], %42 {strides = array<i32>} : memref<1x16x8xf32, #tpu.memory_space<vmem>>, vector<1x16x8xf32>,
    return
  }
  func.func @transform_0(%arg0: i32, %arg1: i32) -> (i32, i32, i32, i32) {
    %c0_i32 = arith.constant 0 : i32
    %c0_i32_0 = arith.constant 0 : i32
    %c0_i32_1 = arith.constant 0 : i32
    return %arg0, %arg1, %c0_i32, %c0_i32_0 : i32, i32, i32, i32
  }
  func.func @transform_1(%arg0: i32, %arg1: i32) -> (i32, i32, i32) {
    %c0_i32 = arith.constant 0 : i32
    %c0_i32_0 = arith.constant 0 : i32
    return %arg0, %arg1, %c0_i32 : i32, i32, i32
  }
  func.func @transform_2(%arg0: i32, %arg1: i32) -> (i32, i32, i32, i32) {
    %c0_i32 = arith.constant 0 : i32
    %c0_i32_0 = arith.constant 0 : i32
    %c0_i32_1 = arith.constant 0 : i32
    return %arg0, %arg1, %c0_i32, %c0_i32_0 : i32, i32, i32, i32
  }
  func.func @transform_3(%arg0: i32, %arg1: i32) -> (i32, i32, i32) {
    %c0_i32 = arith.constant 0 : i32
    %c0_i32_0 = arith.constant 0 : i32
    return %arg0, %arg1, %c0_i32 : i32, i32, i32
  }
  func.func @transform_4(%arg0: i32, %arg1: i32) -> (i32, i32) {
    %c0_i32 = arith.constant 0 : i32
    %c0_i32_0 = arith.constant 0 : i32
    %c0_i32_1 = arith.constant 0 : i32
    return %c0_i32, %c0_i32_0 : i32, i32
  }
  func.func @transform_5(%arg0: i32, %arg1: i32) -> (i32, i32) {
    %c0_i32 = arith.constant 0 : i32
    %c0_i32_0 = arith.constant 0 : i32
    %c0_i32_1 = arith.constant 0 : i32
    return %c0_i32, %c0_i32_0 : i32, i32
  }
  func.func @transform_6(%arg0: i32, %arg1: i32) -> (i32, i32) {
    %c0_i32 = arith.constant 0 : i32
    %c0_i32_0 = arith.constant 0 : i32
    %c0_i32_1 = arith.constant 0 : i32
    return %c0_i32, %c0_i32_0 : i32, i32
  }
  func.func @transform_7(%arg0: i32, %arg1: i32) -> (i32, i32) {
    %c0_i32 = arith.constant 0 : i32
    %c0_i32_0 = arith.constant 0 : i32
    %c0_i32_1 = arith.constant 0 : i32
    return %c0_i32, %c0_i32_0 : i32, i32
  }
  func.func @transform_8(%arg0: i32, %arg1: i32) -> (i32, i32, i32) {
    %c0_i32 = arith.constant 0 : i32
    %c0_i32_0 = arith.constant 0 : i32
    return %arg0, %arg1, %c0_i32 : i32, i32, i32
  }
  func.func @transform_9(%arg0: i32, %arg1: i32) -> (i32, i32, i32) {
    %c0_i32 = arith.constant 0 : i32
    %c0_i32_0 = arith.constant 0 : i32
    return %arg0, %arg1, %c0_i32 : i32, i32, i32
  }
}

</mosaic_0001>

<llo_original>
// kernel: tpu_custom_call.1
$region0: #{tpu_custom_call.1}
  #allocation0 [shape = 'u32[]', space=smem, size = 0x4, offset = 0x4, fixed_abs, tag = 'smem constant byte address 0x4 - core index']
  #allocation1 [shape = 'u32[144,128]{1,0:T(1,128)}', space=vmem, size = 0x12000, scoped, tag = 'internal scratch']
  %s0 = inlined_call_operand.vmem [shape: f32[2,2,2,8], index: 0, kind: input, shape index: {}]
  %s1 = inlined_call_operand.vmem [shape: f32[2,32,8], index: 1, kind: input, shape index: {}]
  %s2 = inlined_call_operand.vmem [shape: f32[2,2,2,8], index: 2, kind: input, shape index: {}]
  %s3 = inlined_call_operand.vmem [shape: f32[2,32,4], index: 3, kind: input, shape index: {}]
  %s4 = inlined_call_operand.vmem [shape: f32[28,16], index: 4, kind: input, shape index: {}]
  %s5 = inlined_call_operand.vmem [shape: f32[1,16], index: 5, kind: input, shape index: {}]
  %s6 = inlined_call_operand.vmem [shape: f32[8,16], index: 6, kind: input, shape index: {}]
  %s7 = inlined_call_operand.vmem [shape: f32[1,16], index: 7, kind: input, shape index: {}]
  %s8 = inlined_call_operand.vmem [shape: f32[2,32,8], index: 8, kind: output, shape index: {0}]
  %s9 = inlined_call_operand.vmem [shape: f32[2,32,8], index: 9, kind: output, shape index: {1}]
  %10 = xla_tuple %s8, %s9
  %s11 = sld [smem:[#allocation0]]
  $region73: #{tpu_custom_call.1} parent=0
    _
  %s13 = ssub.s32 1, %s11
  %s14 = scalar_select 0, %s13, %s11
  loop: start=0, step=1, limit=6
  $region2: #{tpu_custom_call.1} parent=0 // loop_pre_header
    _
  $region3: #{tpu_custom_call.1} parent=0 // loop_header
    %s16 = sphi 0, %s20
    %p17 = scmp.ge.s32.totalorder %s16, 6
    %s23 = sphi 0, %s35
    %s24 = sphi 0, %s31
    %s25 = sphi 0, %s23
    %s26 = sphi 0, %s24
    %s27 = sphi 0, %s25
    %s28 = sphi 0, %s26
    %s40 = sphi 0, %s42
    %s43 = sphi 0, %s40
    %s44 = sphi 0, %s43
    %s60 = sphi 0, %s44
    %s68 = sphi 0, %s70
    %s71 = sphi 0, %s68
    %s72 = sphi 0, %s71
    %s88 = sphi 0, %s72
    %s96 = sphi 0, %s98
    %s99 = sphi 0, %s96
    %s100 = sphi 0, %s99
    %s116 = sphi 0, %s100
    %s124 = sphi 0, %s126
    %s127 = sphi 0, %s124
    %s128 = sphi 0, %s127
    %s144 = sphi 0, %s128
    %s148 = sphi 0, %s148
    %s150 = sphi 0, %s148
    %s151 = sphi 0, %s150
    %s165 = sphi 0, %s151
    %s169 = sphi 0, %s169
    %s171 = sphi 0, %s169
    %s172 = sphi 0, %s171
    %s186 = sphi 0, %s172
    %s190 = sphi 0, %s190
    %s192 = sphi 0, %s190
    %s193 = sphi 0, %s192
    %s207 = sphi 0, %s193
    %s211 = sphi 0, %s211
    %s213 = sphi 0, %s211
    %s214 = sphi 0, %s213
    %s228 = sphi 0, %s214
    %s236 = sphi 0, %s238
    %s239 = sphi 0, %s236
    %s240 = sphi 0, %s239
    %s256 = sphi 0, %s240
    %s264 = sphi 0, %s266
    %s267 = sphi 0, %s264
    %s268 = sphi 0, %s267
    %s284 = sphi 0, %s268
  $region4: #{tpu_custom_call.1} parent=0 // loop_header_branch
    %19 = sbr.rel (%p17) target = $region8
  $region5: #{tpu_custom_call.1} parent=0 // loop_body
    %s21 = ssub.s32 %s16, 1
    %s22 = ssub.s32 %s16, 2
    %s29 = sadd.s32 1, %s24
    %p30 = scmp.ge.s32.totalorder %s29, 2
    %s31 = scalar_select %p30, 0, %s29
    %s32 = sadd.s32 1, %s23
    %s33 = scalar_select %p30, %s32, %s23
    %p34 = scmp.ge.s32.totalorder %s33, 2
    %s35 = scalar_select %p34, 0, %s33
    %s36 = ssub.s32 %s23, %s35
    %s37 = ssub.s32 %s24, %s31
    %s38 = sor.u32 %s36, %s37
    %p39 = scmp.eq.s32.totalorder %s38, 0
    %s41 = sadd.s32 %s40, 1
    %s42 = scalar_select %p39, %s40, %s41
    %p45 = pneg %p39
    %p46 = scmp.eq.s32.totalorder %s16, 3
    %p47 = por %p45, %p46
    %p48 = scmp.ne.s32.totalorder %s40, %s43
    %p49 = scmp.eq.s32.totalorder %s16, 0
    %p50 = por %p48, %p49
    %p51 = scmp.ne.s32.totalorder %s40, %s43
    %p52 = scmp.eq.s32.totalorder %s21, 3
    %p53 = por %p51, %p52
    %p54 = scmp.ne.s32.totalorder %s43, %s44
    %p55 = scmp.eq.s32.totalorder %s21, 0
    %p56 = por %p54, %p55
    %p57 = scmp.ne.s32.totalorder %s43, %s44
    %p58 = scmp.eq.s32.totalorder %s22, 3
    %p59 = por %p57, %p58
    %p61 = scmp.ne.s32.totalorder %s44, %s60
    %p62 = scmp.eq.s32.totalorder %s22, 0
    %p63 = por %p61, %p62
    %s64 = ssub.s32 %s23, %s35
    %s65 = ssub.s32 %s24, %s31
    %s66 = sor.u32 %s64, %s65
    %p67 = scmp.eq.s32.totalorder %s66, 0
    %s69 = sadd.s32 %s68, 1
    %s70 = scalar_select %p67, %s68, %s69
    %p73 = pneg %p67
    %p74 = scmp.eq.s32.totalorder %s16, 3
    %p75 = por %p73, %p74
    %p76 = scmp.ne.s32.totalorder %s68, %s71
    %p77 = scmp.eq.s32.totalorder %s16, 0
    %p78 = por %p76, %p77
    %p79 = scmp.ne.s32.totalorder %s68, %s71
    %p80 = scmp.eq.s32.totalorder %s21, 3
    %p81 = por %p79, %p80
    %p82 = scmp.ne.s32.totalorder %s71, %s72
    %p83 = scmp.eq.s32.totalorder %s21, 0
    %p84 = por %p82, %p83
    %p85 = scmp.ne.s32.totalorder %s71, %s72
    %p86 = scmp.eq.s32.totalorder %s22, 3
    %p87 = por %p85, %p86
    %p89 = scmp.ne.s32.totalorder %s72, %s88
    %p90 = scmp.eq.s32.totalorder %s22, 0
    %p91 = por %p89, %p90
    %s92 = ssub.s32 %s23, %s35
    %s93 = ssub.s32 %s24, %s31
    %s94 = sor.u32 %s92, %s93
    %p95 = scmp.eq.s32.totalorder %s94, 0
    %s97 = sadd.s32 %s96, 1
    %s98 = scalar_select %p95, %s96, %s97
    %p101 = pneg %p95
    %p102 = scmp.eq.s32.totalorder %s16, 3
    %p103 = por %p101, %p102
    %p104 = scmp.ne.s32.totalorder %s96, %s99
    %p105 = scmp.eq.s32.totalorder %s16, 0
    %p106 = por %p104, %p105
    %p107 = scmp.ne.s32.totalorder %s96, %s99
    %p108 = scmp.eq.s32.totalorder %s21, 3
    %p109 = por %p107, %p108
    %p110 = scmp.ne.s32.totalorder %s99, %s100
    %p111 = scmp.eq.s32.totalorder %s21, 0
    %p112 = por %p110, %p111
    %p113 = scmp.ne.s32.totalorder %s99, %s100
    %p114 = scmp.eq.s32.totalorder %s22, 3
    %p115 = por %p113, %p114
    %p117 = scmp.ne.s32.totalorder %s100, %s116
    %p118 = scmp.eq.s32.totalorder %s22, 0
    %p119 = por %p117, %p118
    %s120 = ssub.s32 %s23, %s35
    %s121 = ssub.s32 %s24, %s31
    %s122 = sor.u32 %s120, %s121
    %p123 = scmp.eq.s32.totalorder %s122, 0
    %s125 = sadd.s32 %s124, 1
    %s126 = scalar_select %p123, %s124, %s125
    %p129 = pneg %p123
    %p130 = scmp.eq.s32.totalorder %s16, 3
    %p131 = por %p129, %p130
    %p132 = scmp.ne.s32.totalorder %s124, %s127
    %p133 = scmp.eq.s32.totalorder %s16, 0
    %p134 = por %p132, %p133
    %p135 = scmp.ne.s32.totalorder %s124, %s127
    %p136 = scmp.eq.s32.totalorder %s21, 3
    %p137 = por %p135, %p136
    %p138 = scmp.ne.s32.totalorder %s127, %s128
    %p139 = scmp.eq.s32.totalorder %s21, 0
    %p140 = por %p138, %p139
    %p141 = scmp.ne.s32.totalorder %s127, %s128
    %p142 = scmp.eq.s32.totalorder %s22, 3
    %p143 = por %p141, %p142
    %p145 = scmp.ne.s32.totalorder %s128, %s144
    %p146 = scmp.eq.s32.totalorder %s22, 0
    %p147 = por %p145, %p146
    %s149 = sadd.s32 %s148, 1
    %p152 = scmp.eq.s32.totalorder %s16, 3
    %p153 = scmp.ne.s32.totalorder %s148, %s150
    %p154 = scmp.eq.s32.totalorder %s16, 0
    %p155 = por %p153, %p154
    %p156 = scmp.ne.s32.totalorder %s148, %s150
    %p157 = scmp.eq.s32.totalorder %s21, 3
    %p158 = por %p156, %p157
    %p159 = scmp.ne.s32.totalorder %s150, %s151
    %p160 = scmp.eq.s32.totalorder %s21, 0
    %p161 = por %p159, %p160
    %p162 = scmp.ne.s32.totalorder %s150, %s151
    %p163 = scmp.eq.s32.totalorder %s22, 3
    %p164 = por %p162, %p163
    %p166 = scmp.ne.s32.totalorder %s151, %s165
    %p167 = scmp.eq.s32.totalorder %s22, 0
    %p168 = por %p166, %p167
    %s170 = sadd.s32 %s169, 1
    %p173 = scmp.eq.s32.totalorder %s16, 3
    %p174 = scmp.ne.s32.totalorder %s169, %s171
    %p175 = scmp.eq.s32.totalorder %s16, 0
    %p176 = por %p174, %p175
    %p177 = scmp.ne.s32.totalorder %s169, %s171
    %p178 = scmp.eq.s32.totalorder %s21, 3
    %p179 = por %p177, %p178
    %p180 = scmp.ne.s32.totalorder %s171, %s172
    %p181 = scmp.eq.s32.totalorder %s21, 0
    %p182 = por %p180, %p181
    %p183 = scmp.ne.s32.totalorder %s171, %s172
    %p184 = scmp.eq.s32.totalorder %s22, 3
    %p185 = por %p183, %p184
    %p187 = scmp.ne.s32.totalorder %s172, %s186
    %p188 = scmp.eq.s32.totalorder %s22, 0
    %p189 = por %p187, %p188
    %s191 = sadd.s32 %s190, 1
    %p194 = scmp.eq.s32.totalorder %s16, 3
    %p195 = scmp.ne.s32.totalorder %s190, %s192
    %p196 = scmp.eq.s32.totalorder %s16, 0
    %p197 = por %p195, %p196
    %p198 = scmp.ne.s32.totalorder %s190, %s192
    %p199 = scmp.eq.s32.totalorder %s21, 3
    %p200 = por %p198, %p199
    %p201 = scmp.ne.s32.totalorder %s192, %s193
    %p202 = scmp.eq.s32.totalorder %s21, 0
    %p203 = por %p201, %p202
    %p204 = scmp.ne.s32.totalorder %s192, %s193
    %p205 = scmp.eq.s32.totalorder %s22, 3
    %p206 = por %p204, %p205
    %p208 = scmp.ne.s32.totalorder %s193, %s207
    %p209 = scmp.eq.s32.totalorder %s22, 0
    %p210 = por %p208, %p209
    %s212 = sadd.s32 %s211, 1
    %p215 = scmp.eq.s32.totalorder %s16, 3
    %p216 = scmp.ne.s32.totalorder %s211, %s213
    %p217 = scmp.eq.s32.totalorder %s16, 0
    %p218 = por %p216, %p217
    %p219 = scmp.ne.s32.totalorder %s211, %s213
    %p220 = scmp.eq.s32.totalorder %s21, 3
    %p221 = por %p219, %p220
    %p222 = scmp.ne.s32.totalorder %s213, %s214
    %p223 = scmp.eq.s32.totalorder %s21, 0
    %p224 = por %p222, %p223
    %p225 = scmp.ne.s32.totalorder %s213, %s214
    %p226 = scmp.eq.s32.totalorder %s22, 3
    %p227 = por %p225, %p226
    %p229 = scmp.ne.s32.totalorder %s214, %s228
    %p230 = scmp.eq.s32.totalorder %s22, 0
    %p231 = por %p229, %p230
    %s232 = ssub.s32 %s23, %s35
    %s233 = ssub.s32 %s24, %s31
    %s234 = sor.u32 %s232, %s233
    %p235 = scmp.eq.s32.totalorder %s234, 0
    %s237 = sadd.s32 %s236, 1
    %s238 = scalar_select %p235, %s236, %s237
    %p241 = pneg %p235
    %p242 = scmp.eq.s32.totalorder %s16, 3
    %p243 = por %p241, %p242
    %p244 = scmp.ne.s32.totalorder %s236, %s239
    %p245 = scmp.eq.s32.totalorder %s16, 0
    %p246 = por %p244, %p245
    %p247 = scmp.ne.s32.totalorder %s236, %s239
    %p248 = scmp.eq.s32.totalorder %s21, 3
    %p249 = por %p247, %p248
    %p250 = scmp.ne.s32.totalorder %s239, %s240
    %p251 = scmp.eq.s32.totalorder %s21, 0
    %p252 = por %p250, %p251
    %p253 = scmp.ne.s32.totalorder %s239, %s240
    %p254 = scmp.eq.s32.totalorder %s22, 3
    %p255 = por %p253, %p254
    %p257 = scmp.ne.s32.totalorder %s240, %s256
    %p258 = scmp.eq.s32.totalorder %s22, 0
    %p259 = por %p257, %p258
    %s260 = ssub.s32 %s23, %s35
    %s261 = ssub.s32 %s24, %s31
    %s262 = sor.u32 %s260, %s261
    %p263 = scmp.eq.s32.totalorder %s262, 0
    %s265 = sadd.s32 %s264, 1
    %s266 = scalar_select %p263, %s264, %s265
    %p269 = pneg %p263
    %p270 = scmp.eq.s32.totalorder %s16, 3
    %p271 = por %p269, %p270
    %p272 = scmp.ne.s32.totalorder %s264, %s267
    %p273 = scmp.eq.s32.totalorder %s16, 0
    %p274 = por %p272, %p273
    %p275 = scmp.ne.s32.totalorder %s264, %s267
    %p276 = scmp.eq.s32.totalorder %s21, 3
    %p277 = por %p275, %p276
    %p278 = scmp.ne.s32.totalorder %s267, %s268
    %p279 = scmp.eq.s32.totalorder %s21, 0
    %p280 = por %p278, %p279
    %p281 = scmp.ne.s32.totalorder %s267, %s268
    %p282 = scmp.eq.s32.totalorder %s22, 3
    %p283 = por %p281, %p282
    %p285 = scmp.ne.s32.totalorder %s268, %s284
    %p286 = scmp.eq.s32.totalorder %s22, 0
    %p287 = por %p285, %p286
    %p288 = scmp.le.s32.totalorder 1, %s16
    %p289 = scmp.lt.s32.totalorder %s16, 5
    %p290 = pnand %p288, %p289
    %p291 = pneg %p290
    // Predicated region
    $region9: #{tpu_custom_call.1} parent=5 // pred_check
      _
    $region10: #{tpu_custom_call.1} parent=5 // pred_check_branch
      %293 = sbr.rel (%p290) target = $region12
    $region11: #{tpu_custom_call.1} parent=5 // pred_region
      %s294 = ssub.s32 %s16, 1
      // Predicated region
      $region13: #{tpu_custom_call.1} parent=11 // pred_check
        %p295 = pneg %p161
      $region14: #{tpu_custom_call.1} parent=11 // pred_check_branch
        %297 = sbr.rel (%p295) target = $region16
      $region15: #{tpu_custom_call.1} parent=11 // pred_region
        _
      $region16: #{tpu_custom_call.1} parent=11 // pred_fallthru
        _
      // Predicated region
      $region17: #{tpu_custom_call.1} parent=11 // pred_check
        %p298 = pneg %p182
      $region18: #{tpu_custom_call.1} parent=11 // pred_check_branch
        %300 = sbr.rel (%p298) target = $region20
      $region19: #{tpu_custom_call.1} parent=11 // pred_region
        _
      $region20: #{tpu_custom_call.1} parent=11 // pred_fallthru
        _
      // Predicated region
      $region21: #{tpu_custom_call.1} parent=11 // pred_check
        %p301 = pneg %p203
      $region22: #{tpu_custom_call.1} parent=11 // pred_check_branch
        %303 = sbr.rel (%p301) target = $region24
      $region23: #{tpu_custom_call.1} parent=11 // pred_region
        _
      $region24: #{tpu_custom_call.1} parent=11 // pred_fallthru
        _
      // Predicated region
      $region25: #{tpu_custom_call.1} parent=11 // pred_check
        %p304 = pneg %p224
      $region26: #{tpu_custom_call.1} parent=11 // pred_check_branch
        %306 = sbr.rel (%p304) target = $region28
      $region27: #{tpu_custom_call.1} parent=11 // pred_region
        _
      $region28: #{tpu_custom_call.1} parent=11 // pred_fallthru
        _
    $region12: #{tpu_custom_call.1} parent=5 // pred_fallthru
      _
    %p307 = scmp.lt.s32.totalorder %s16, 4
    // Predicated region
    $region29: #{tpu_custom_call.1} parent=5 // pred_check
      %p308 = pneg %p307
    $region30: #{tpu_custom_call.1} parent=5 // pred_check_branch
      %310 = sbr.rel (%p308) target = $region32
    $region31: #{tpu_custom_call.1} parent=5 // pred_region
      // Predicated region
      $region33: #{tpu_custom_call.1} parent=31 // pred_check
        %p311 = pneg %p50
      $region34: #{tpu_custom_call.1} parent=31 // pred_check_branch
        %313 = sbr.rel (%p311) target = $region36
      $region35: #{tpu_custom_call.1} parent=31 // pred_region
        %p314 = scmp.lt.s32.totalorder %s23, 1
        %s315 = scalar_select %p314, %s23, 1
        %p316 = scmp.lt.s32.totalorder %s24, 1
        %s317 = scalar_select %p316, %s24, 1
        %s318 = smul.addr %s315, 2
        %s319 = sadd.s32 %s317, %s318
        %s320 = smul.addr %s319, 2
        %s321 = scalar_lea.vmem %s0, %s320
      $region36: #{tpu_custom_call.1} parent=31 // pred_fallthru
        _
      // Predicated region
      $region37: #{tpu_custom_call.1} parent=31 // pred_check
        %p322 = pneg %p78
      $region38: #{tpu_custom_call.1} parent=31 // pred_check_branch
        %324 = sbr.rel (%p322) target = $region40
      $region39: #{tpu_custom_call.1} parent=31 // pred_region
        %s325 = smul.u32 2, %s24
        %p326 = scmp.lt.s32.totalorder %s23, 1
        %s327 = scalar_select %p326, %s23, 1
        %p328 = scmp.lt.s32.totalorder %s325, 3
        %s329 = scalar_select %p328, %s325, 3
        %s330 = smul.addr %s327, 4
        %s331 = sadd.s32 %s329, %s330
        %s332 = smul.addr %s331, 8
        %s333 = scalar_lea.vmem %s1, %s332
        %s334 = smul.u32 2, %s24
      $region40: #{tpu_custom_call.1} parent=31 // pred_fallthru
        _
      // Predicated region
      $region41: #{tpu_custom_call.1} parent=31 // pred_check
        %p335 = pneg %p106
      $region42: #{tpu_custom_call.1} parent=31 // pred_check_branch
        %337 = sbr.rel (%p335) target = $region44
      $region43: #{tpu_custom_call.1} parent=31 // pred_region
        %p338 = scmp.lt.s32.totalorder %s23, 1
        %s339 = scalar_select %p338, %s23, 1
        %p340 = scmp.lt.s32.totalorder %s24, 1
        %s341 = scalar_select %p340, %s24, 1
        %s342 = smul.addr %s339, 2
        %s343 = sadd.s32 %s341, %s342
        %s344 = smul.addr %s343, 2
        %s345 = scalar_lea.vmem %s2, %s344
      $region44: #{tpu_custom_call.1} parent=31 // pred_fallthru
        _
      // Predicated region
      $region45: #{tpu_custom_call.1} parent=31 // pred_check
        %p346 = pneg %p134
      $region46: #{tpu_custom_call.1} parent=31 // pred_check_branch
        %348 = sbr.rel (%p346) target = $region48
      $region47: #{tpu_custom_call.1} parent=31 // pred_region
        %s349 = smul.u32 2, %s24
        %p350 = scmp.lt.s32.totalorder %s23, 1
        %s351 = scalar_select %p350, %s23, 1
        %p352 = scmp.lt.s32.totalorder %s349, 3
        %s353 = scalar_select %p352, %s349, 3
        %s354 = smul.addr %s351, 4
        %s355 = sadd.s32 %s353, %s354
        %s356 = smul.addr %s355, 8
        %s357 = scalar_lea.vmem %s3, %s356
        %s358 = smul.u32 2, %s24
      $region48: #{tpu_custom_call.1} parent=31 // pred_fallthru
        _
    $region32: #{tpu_custom_call.1} parent=5 // pred_fallthru
      _
    %p359 = scmp.le.s32.totalorder 1, %s16
    %p360 = scmp.lt.s32.totalorder %s16, 5
    %p361 = pnand %p359, %p360
    %p362 = pneg %p361
    // Predicated region
    $region49: #{tpu_custom_call.1} parent=5 // pred_check
      _
    $region50: #{tpu_custom_call.1} parent=5 // pred_check_branch
      %364 = sbr.rel (%p361) target = $region52
    $region51: #{tpu_custom_call.1} parent=5 // pred_region
      %s365 = ssub.s32 %s16, 1
      %p366 = scmp.lt.s32.totalorder %s25, 1
      %s367 = scalar_select %p366, %s25, 1
      %p368 = scmp.lt.s32.totalorder %s26, 1
      %s369 = scalar_select %p368, %s26, 1
      %s370 = smul.addr %s367, 2
      %s371 = sadd.s32 %s369, %s370
      %s372 = smul.addr %s371, 2
      %s373 = scalar_lea.vmem %s0, %s372
      %p374 = pneg %p56
      %p375 = pneg %p53
      %s376 = smul.u32 2, %s26
      %p377 = scmp.lt.s32.totalorder %s25, 1
      %s378 = scalar_select %p377, %s25, 1
      %p379 = scmp.lt.s32.totalorder %s376, 3
      %s380 = scalar_select %p379, %s376, 3
      %s381 = smul.addr %s378, 4
      %s382 = sadd.s32 %s380, %s381
      %s383 = smul.addr %s382, 8
      %s384 = scalar_lea.vmem %s1, %s383
      %p385 = pneg %p84
      %p386 = pneg %p81
      %p387 = scmp.lt.s32.totalorder %s25, 1
      %s388 = scalar_select %p387, %s25, 1
      %p389 = scmp.lt.s32.totalorder %s26, 1
      %s390 = scalar_select %p389, %s26, 1
      %s391 = smul.addr %s388, 2
      %s392 = sadd.s32 %s390, %s391
      %s393 = smul.addr %s392, 2
      %s394 = scalar_lea.vmem %s2, %s393
      %p395 = pneg %p112
      %p396 = pneg %p109
      %s397 = smul.u32 2, %s26
      %p398 = scmp.lt.s32.totalorder %s25, 1
      %s399 = scalar_select %p398, %s25, 1
      %p400 = scmp.lt.s32.totalorder %s397, 3
      %s401 = scalar_select %p400, %s397, 3
      %s402 = smul.addr %s399, 4
      %s403 = sadd.s32 %s401, %s402
      %s404 = smul.addr %s403, 8
      %s405 = scalar_lea.vmem %s3, %s404
      %p406 = pneg %p140
      %p407 = pneg %p137
      %p408 = pneg %p161
      %p409 = pneg %p158
      %p410 = pneg %p182
      %p411 = pneg %p179
      %p412 = pneg %p203
      %p413 = pneg %p200
      %p414 = pneg %p224
      %p415 = pneg %p221
      %p416 = pneg %p252
      %p417 = pneg %p249
      %s418 = smul.u32 2, %s26
      %p419 = scmp.lt.s32.totalorder %s25, 1
      %s420 = scalar_select %p419, %s25, 1
      %p421 = scmp.lt.s32.totalorder %s418, 3
      %s422 = scalar_select %p421, %s418, 3
      %s423 = smul.addr %s420, 4
      %s424 = sadd.s32 %s422, %s423
      %s425 = smul.addr %s424, 8
      %s426 = scalar_lea.vmem %s8, %s425
      %p427 = pneg %p280
      %p428 = pneg %p277
      %s429 = smul.u32 2, %s26
      %p430 = scmp.lt.s32.totalorder %s25, 1
      %s431 = scalar_select %p430, %s25, 1
      %p432 = scmp.lt.s32.totalorder %s429, 3
      %s433 = scalar_select %p432, %s429, 3
      %s434 = smul.addr %s431, 4
      %s435 = sadd.s32 %s433, %s434
      %s436 = smul.addr %s435, 8
      %s437 = scalar_lea.vmem %s9, %s436
      %p438 = scmp.lt.s32.totalorder %s25, 1
      %s439 = scalar_select %p438, %s25, 1
      %p440 = scmp.lt.s32.totalorder %s26, 1
      %s441 = scalar_select %p440, %s26, 1
      %s442 = smul.addr %s439, 2
      %s443 = sadd.s32 %s441, %s442
      %s444 = smul.addr %s443, 2
      %s445 = scalar_lea.vmem %s0, %s444
      %s446 = smul.u32 2, %s26
      %p447 = scmp.lt.s32.totalorder %s25, 1
      %s448 = scalar_select %p447, %s25, 1
      %p449 = scmp.lt.s32.totalorder %s446, 3
      %s450 = scalar_select %p449, %s446, 3
      %s451 = smul.addr %s448, 4
      %s452 = sadd.s32 %s450, %s451
      %s453 = smul.addr %s452, 8
      %s454 = scalar_lea.vmem %s1, %s453
      %s455 = smul.u32 2, %s26
      %p456 = scmp.lt.s32.totalorder %s25, 1
      %s457 = scalar_select %p456, %s25, 1
      %p458 = scmp.lt.s32.totalorder %s26, 1
      %s459 = scalar_select %p458, %s26, 1
      %s460 = smul.addr %s457, 2
      %s461 = sadd.s32 %s459, %s460
      %s462 = smul.addr %s461, 2
      %s463 = scalar_lea.vmem %s2, %s462
      %s464 = smul.u32 2, %s26
      %p465 = scmp.lt.s32.totalorder %s25, 1
      %s466 = scalar_select %p465, %s25, 1
      %p467 = scmp.lt.s32.totalorder %s464, 3
      %s468 = scalar_select %p467, %s464, 3
      %s469 = smul.addr %s466, 4
      %s470 = sadd.s32 %s468, %s469
      %s471 = smul.addr %s470, 8
      %s472 = scalar_lea.vmem %s3, %s471
      %s473 = smul.u32 2, %s26
      %s474 = smul.u32 2, %s26
      %p475 = scmp.lt.s32.totalorder %s25, 1
      %s476 = scalar_select %p475, %s25, 1
      %p477 = scmp.lt.s32.totalorder %s474, 3
      %s478 = scalar_select %p477, %s474, 3
      %s479 = smul.addr %s476, 4
      %s480 = sadd.s32 %s478, %s479
      %s481 = smul.addr %s480, 8
      %s482 = scalar_lea.vmem %s8, %s481
      %s483 = smul.u32 2, %s26
      %s484 = smul.u32 2, %s26
      %p485 = scmp.lt.s32.totalorder %s25, 1
      %s486 = scalar_select %p485, %s25, 1
      %p487 = scmp.lt.s32.totalorder %s484, 3
      %s488 = scalar_select %p487, %s484, 3
      %s489 = smul.addr %s486, 4
      %s490 = sadd.s32 %s488, %s489
      %s491 = smul.addr %s490, 8
      %s492 = scalar_lea.vmem %s9, %s491
      %s493 = smul.u32 2, %s26
      %v494 = vld [vmem:[%s454] sm:$0xff]
      %v495 = vld [vmem:[%s454 + $0x8] sm:$0xff]
      %v496 = vld [vmem:[%s472] sm:$0xff]
      %v497 = vld [vmem:[%s472 + $0x8] sm:$0xff]
      %v498 = vld [vmem:[%s445] sm:$0x3]
      %v499 = vld [vmem:[%s463] sm:$0x3]
      %vm502 = vcmask 1041408
      %v503 = vrot.slane %v494, 6
      %v504 = vrot.slane %v495, 6
      %v505 = vsel %vm502, %v503, %v504
      %v510 = vrot.slane %v499, 6
      %v512 = vsel %vm502, %v498, %v503
      %v513 = vsel %vm502, %v504, %v510
      %vm516 = vcmask 1045504
      %v517 = vrot.slane %v512, 2
      %v518 = vrot.slane %v505, 2
      %v519 = vsel %vm516, %v517, %v518
      %v520 = vrot.slane %v513, 2
      %v521 = vsel %vm516, %v518, %v520
      %522 = vrot.lane.b32.xlu0 %v519, 8
      %v523 = vpop.permute.xlu0 %522
      %524 = vrot.lane.b32.xlu0 %v521, 8
      %v525 = vpop.permute.xlu0 %524
      %vm528 = vcmask 1043456
      %v529 = vrot.slane %v512, 4
      %v530 = vrot.slane %v505, 4
      %v531 = vsel %vm528, %v529, %v530
      %v532 = vrot.slane %v513, 4
      %v533 = vsel %vm528, %v530, %v532
      %534 = vrot.lane.b32.xlu0 %v531, 16
      %v535 = vpop.permute.xlu0 %534
      %536 = vrot.lane.b32.xlu0 %v533, 16
      %v537 = vpop.permute.xlu0 %536
      %542 = vrot.lane.b32.xlu0 %v496, 24
      %v543 = vpop.permute.xlu0 %542
      %544 = vrot.lane.b32.xlu0 %v497, 24
      %v545 = vpop.permute.xlu0 %544
      %vm548 = vcmask 64512
      %v549 = vsel %vm548, %v512, %v523
      %v550 = vsel %vm548, %v505, %v525
      %vm551 = vcmask 130048
      %v552 = vsel %vm551, %v549, %v535
      %v553 = vsel %vm551, %v550, %v537
      %vm554 = vcmask 195584
      %v555 = vsel %vm554, %v552, %v543
      %v556 = vsel %vm554, %v553, %v545
      %v557 = vld [vmem:[%s4] sm:$0xff]
      %v558 = vld [vmem:[%s4 + $0x8] sm:$0xff]
      %v559 = vld [vmem:[%s4 + $0x10] sm:$0xff]
      %v560 = vld [vmem:[%s4 + $0x18] sm:$0xf]
      %v561 = vld [vmem:[%s5] sm:$0x1]
      %v563 = vlaneseq
      %v564 = vshrl.u32 %v563, 7
      %v565 = vsub.s32 0, %v564
      %v566 = vrot.slane %v561, %v565
      %vm568 = vcmask 228352
      %v570 = vsel %vm568, %v555, 0
      %v573 = vsel %vm568, %v556, 0
      %v576 = vsel %vm528, %v560, 0
      %578 = vmatprep.subr.mxu0 0.0
      %579 = vmatpush1.msra.mxu0 %v557
      %580 = vmatprep.subr.mxu0 0.0
      %581 = vmatpush1.msra.mxu0 %v558
      %582 = vmatprep.subr.mxu0 0.0
      %583 = vmatpush1.msra.mxu0 %v559
      %584 = vmatprep.subr.mxu0 0.0
      %585 = vmatpush1.msra.mxu0 %v576
      %586 = vmatprep.subr.mxu0 0.0
      %587 = vmatpush1.msra.mxu0 0.0
      %588 = vmatprep.subr.mxu0 0.0
      %589 = vmatpush1.msra.mxu0 0.0
      %590 = vmatprep.subr.mxu0 0.0
      %591 = vmatpush1.msra.mxu0 0.0
      %592 = vmatprep.subr.mxu0 0.0
      %593 = vmatpush1.msra.mxu0 0.0
      %594 = vmatprep.subr.mxu0 0.0
      %595 = vmatpush1.msra.mxu0 0.0
      %596 = vmatprep.subr.mxu0 0.0
      %597 = vmatpush1.msra.mxu0 0.0
      %598 = vmatprep.subr.mxu0 0.0
      %599 = vmatpush1.msra.mxu0 0.0
      %600 = vmatprep.subr.mxu0 0.0
      %601 = vmatpush1.msra.mxu0 0.0
      %602 = vmatprep.subr.mxu0 0.0
      %603 = vmatpush1.msra.mxu0 0.0
      %604 = vmatprep.subr.mxu0 0.0
      %605 = vmatpush1.msra.mxu0 0.0
      %606 = vmatprep.subr.mxu0 0.0
      %607 = vmatpush1.msra.mxu0 0.0
      %608 = vmatprep.subr.mxu0 0.0
      %609 = vmatpush1.msra.mxu0 0.0
      %610 = vmatprep.subr.mxu0 0.0
      %611 = vmatpush1.msra.mxu0 0.0
      %612 = vmatprep.subr.mxu0 0.0
      %613 = vmatpush1.msra.mxu0 0.0
      %614 = vmatprep.subr.mxu0 0.0
      %615 = vmatpush1.msra.mxu0 0.0
      %616 = vmatprep.subr.mxu0 0.0
      %617 = vmatpush1.msra.mxu0 0.0
      %618 = vmatprep.subr.mxu0 0.0
      %619 = vmatpush1.msra.mxu0 0.0
      %620 = vmatprep.subr.mxu0 0.0
      %621 = vmatpush1.msra.mxu0 0.0
      %622 = vmatprep.subr.mxu0 0.0
      %623 = vmatpush1.msra.mxu0 0.0
      %624 = vmatprep.subr.mxu0 0.0
      %625 = vmatpush1.msra.mxu0 0.0
      %626 = vmatprep.subr.mxu0 0.0
      %627 = vmatpush1.msra.mxu0 0.0
      %628 = vmatprep.subr.mxu0 0.0
      %629 = vmatpush1.msra.mxu0 0.0
      %630 = vmatprep.subr.mxu0 0.0
      %631 = vmatpush1.msra.mxu0 0.0
      %632 = vmatprep.subr.mxu0 0.0
      %633 = vmatpush1.msra.mxu0 0.0
      %634 = vmatprep.subr.mxu0 0.0
      %635 = vmatpush1.msra.mxu0 0.0
      %636 = vmatprep.subr.mxu0 0.0
      %637 = vmatpush1.msra.mxu0 0.0
      %638 = vmatprep.subr.mxu0 0.0
      %639 = vmatpush1.msra.mxu0 0.0
      %640 = vmatprep.subr.mxu0 0.0
      %641 = vmatpush1.msra.mxu0 0.0
      %642 = vmatprep.mubr.f32.mxu0 0.0
      %643 = vmatmul.mubr.f32.gmra.mrb[0].mxu0 %v570
      %v644 = vpop.f32.mrb[0].mxu0
      %v645 = vadd.f32 %v566, %v644
      %v646 = vpop.f32.mrb[0].mxu0
      %647 = vmatprep.mubr.f32.mxu0 0.0
      %648 = vmatmul.mubr.f32.gmra.mrb[0].mxu0 %v573
      %v649 = vpop.f32.mrb[0].mxu0
      %v650 = vadd.f32 %v566, %v649
      %v651 = vpop.f32.mrb[0].mxu0
      %652 = vdwg.mxu0
      %v653 = vtanh.pop %v645
      %v654 = vtanh.pop %v650
      %v655 = vxor.u32 %v645, 2147483648
      %v656 = vxor.u32 %v650, 2147483648
      %v657 = vmul.f32 %v655, 1.442695
      %v658 = vpow.pop %v657
      %v659 = vmul.f32 %v656, 1.442695
      %v660 = vpow.pop %v659
      %v661 = vadd.f32 %v658, 1.0
      %v662 = vadd.f32 %v660, 1.0
      %v663 = vrcp.pop %v661
      %v664 = vmul.f32 1.0, %v663
      %v665 = vrcp.pop %v662
      %v666 = vmul.f32 1.0, %v665
      %669 = vrot.lane.b32.xlu0 %v664, 120
      %v670 = vpop.permute.xlu0 %669
      %671 = vrot.lane.b32.xlu0 %v666, 120
      %v672 = vpop.permute.xlu0 %671
      %v675 = vmul.f32 %v653, %v670
      %v676 = vmul.f32 %v654, %v672
      %v677 = vld [vmem:[%s6] sm:$0xff]
      %v678 = vld [vmem:[%s7] sm:$0x1]
      %v680 = vlaneseq
      %v681 = vshrl.u32 %v680, 7
      %v682 = vsub.s32 0, %v681
      %v683 = vrot.slane %v678, %v682
      %v686 = vsel %vm548, %v675, 0
      %v689 = vsel %vm548, %v676, 0
      %691 = vmatprep.subr.mxu0 0.0
      %692 = vmatpush1.msra.mxu0 %v677
      %693 = vmatprep.subr.mxu0 0.0
      %694 = vmatpush1.msra.mxu0 0.0
      %695 = vmatprep.subr.mxu0 0.0
      %696 = vmatpush1.msra.mxu0 0.0
      %697 = vmatprep.subr.mxu0 0.0
      %698 = vmatpush1.msra.mxu0 0.0
      %699 = vmatprep.subr.mxu0 0.0
      %700 = vmatpush1.msra.mxu0 0.0
      %701 = vmatprep.subr.mxu0 0.0
      %702 = vmatpush1.msra.mxu0 0.0
      %703 = vmatprep.subr.mxu0 0.0
      %704 = vmatpush1.msra.mxu0 0.0
      %705 = vmatprep.subr.mxu0 0.0
      %706 = vmatpush1.msra.mxu0 0.0
      %707 = vmatprep.subr.mxu0 0.0
      %708 = vmatpush1.msra.mxu0 0.0
      %709 = vmatprep.subr.mxu0 0.0
      %710 = vmatpush1.msra.mxu0 0.0
      %711 = vmatprep.subr.mxu0 0.0
      %712 = vmatpush1.msra.mxu0 0.0
      %713 = vmatprep.subr.mxu0 0.0
      %714 = vmatpush1.msra.mxu0 0.0
      %715 = vmatprep.subr.mxu0 0.0
      %716 = vmatpush1.msra.mxu0 0.0
      %717 = vmatprep.subr.mxu0 0.0
      %718 = vmatpush1.msra.mxu0 0.0
      %719 = vmatprep.subr.mxu0 0.0
      %720 = vmatpush1.msra.mxu0 0.0
      %721 = vmatprep.subr.mxu0 0.0
      %722 = vmatpush1.msra.mxu0 0.0
      %723 = vmatprep.subr.mxu0 0.0
      %724 = vmatpush1.msra.mxu0 0.0
      %725 = vmatprep.subr.mxu0 0.0
      %726 = vmatpush1.msra.mxu0 0.0
      %727 = vmatprep.subr.mxu0 0.0
      %728 = vmatpush1.msra.mxu0 0.0
      %729 = vmatprep.subr.mxu0 0.0
      %730 = vmatpush1.msra.mxu0 0.0
      %731 = vmatprep.subr.mxu0 0.0
      %732 = vmatpush1.msra.mxu0 0.0
      %733 = vmatprep.subr.mxu0 0.0
      %734 = vmatpush1.msra.mxu0 0.0
      %735 = vmatprep.subr.mxu0 0.0
      %736 = vmatpush1.msra.mxu0 0.0
      %737 = vmatprep.subr.mxu0 0.0
      %738 = vmatpush1.msra.mxu0 0.0
      %739 = vmatprep.subr.mxu0 0.0
      %740 = vmatpush1.msra.mxu0 0.0
      %741 = vmatprep.subr.mxu0 0.0
      %742 = vmatpush1.msra.mxu0 0.0
      %743 = vmatprep.subr.mxu0 0.0
      %744 = vmatpush1.msra.mxu0 0.0
      %745 = vmatprep.subr.mxu0 0.0
      %746 = vmatpush1.msra.mxu0 0.0
      %747 = vmatprep.subr.mxu0 0.0
      %748 = vmatpush1.msra.mxu0 0.0
      %749 = vmatprep.subr.mxu0 0.0
      %750 = vmatpush1.msra.mxu0 0.0
      %751 = vmatprep.subr.mxu0 0.0
      %752 = vmatpush1.msra.mxu0 0.0
      %753 = vmatprep.subr.mxu0 0.0
      %754 = vmatpush1.msra.mxu0 0.0
      %755 = vmatprep.mubr.f32.mxu0 0.0
      %756 = vmatmul.mubr.f32.gmra.mrb[0].mxu0 %v686
      %v757 = vpop.f32.mrb[0].mxu0
      %v758 = vadd.f32 %v683, %v757
      %v759 = vpop.f32.mrb[0].mxu0
      %760 = vmatprep.mubr.f32.mxu0 0.0
      %761 = vmatmul.mubr.f32.gmra.mrb[0].mxu0 %v689
      %v762 = vpop.f32.mrb[0].mxu0
      %v763 = vadd.f32 %v683, %v762
      %v764 = vpop.f32.mrb[0].mxu0
      %765 = vdwg.mxu0
      %v766 = vadd.f32 %v758, %v494
      %v767 = vadd.f32 %v763, %v495
      %v768 = vmul.f32 %v766, 0.70710677
      %v769 = vmul.f32 %v767, 0.70710677
      %770 = vst.msk [vmem:[%s482] sm:$0xff] %vm548, %v768
      %771 = vst.msk [vmem:[%s482 + $0x8] sm:$0xff] %vm548, %v769
      %774 = vrot.lane.b32.xlu0 %v758, 120
      %v775 = vpop.permute.xlu0 %774
      %776 = vrot.lane.b32.xlu0 %v763, 120
      %v777 = vpop.permute.xlu0 %776
      %780 = vst.msk [vmem:[%s492] sm:$0xff] %vm548, %v775
      %781 = vst.msk [vmem:[%s492 + $0x8] sm:$0xff] %vm548, %v777
      %s782 = smul.u32 2, %s26
      %p783 = scmp.lt.s32.totalorder %s25, 1
      %s784 = scalar_select %p783, %s25, 1
      %p785 = scmp.lt.s32.totalorder %s782, 3
      %s786 = scalar_select %p785, %s782, 3
      %s787 = smul.addr %s784, 4
      %s788 = sadd.s32 %s786, %s787
      %s789 = smul.addr %s788, 8
      %s790 = scalar_lea.vmem %s8, %s789
      %s791 = smul.u32 2, %s26
      %p792 = scmp.lt.s32.totalorder %s25, 1
      %s793 = scalar_select %p792, %s25, 1
      %p794 = scmp.lt.s32.totalorder %s791, 3
      %s795 = scalar_select %p794, %s791, 3
      %s796 = smul.addr %s793, 4
      %s797 = sadd.s32 %s795, %s796
      %s798 = smul.addr %s797, 8
      %s799 = scalar_lea.vmem %s9, %s798
      // Predicated region
      $region53: #{tpu_custom_call.1} parent=51 // pred_check
        %p800 = pneg %p249
      $region54: #{tpu_custom_call.1} parent=51 // pred_check_branch
        %802 = sbr.rel (%p800) target = $region56
      $region55: #{tpu_custom_call.1} parent=51 // pred_region
        %s803 = smul.u32 2, %s26
      $region56: #{tpu_custom_call.1} parent=51 // pred_fallthru
        _
      // Predicated region
      $region57: #{tpu_custom_call.1} parent=51 // pred_check
        %p804 = pneg %p277
      $region58: #{tpu_custom_call.1} parent=51 // pred_check_branch
        %806 = sbr.rel (%p804) target = $region60
      $region59: #{tpu_custom_call.1} parent=51 // pred_region
        %s807 = smul.u32 2, %s26
      $region60: #{tpu_custom_call.1} parent=51 // pred_fallthru
        _
    $region52: #{tpu_custom_call.1} parent=5 // pred_fallthru
      _
    %p808 = scmp.le.s32.totalorder 2, %s16
    // Predicated region
    $region61: #{tpu_custom_call.1} parent=5 // pred_check
      %p809 = pneg %p808
    $region62: #{tpu_custom_call.1} parent=5 // pred_check_branch
      %811 = sbr.rel (%p809) target = $region64
    $region63: #{tpu_custom_call.1} parent=5 // pred_region
      %s812 = ssub.s32 %s16, 2
      // Predicated region
      $region65: #{tpu_custom_call.1} parent=63 // pred_check
        %p813 = pneg %p255
      $region66: #{tpu_custom_call.1} parent=63 // pred_check_branch
        %815 = sbr.rel (%p813) target = $region68
      $region67: #{tpu_custom_call.1} parent=63 // pred_region
        %s816 = smul.u32 2, %s28
        %p817 = scmp.lt.s32.totalorder %s27, 1
        %s818 = scalar_select %p817, %s27, 1
        %p819 = scmp.lt.s32.totalorder %s816, 3
        %s820 = scalar_select %p819, %s816, 3
        %s821 = smul.addr %s818, 4
        %s822 = sadd.s32 %s820, %s821
        %s823 = smul.addr %s822, 8
        %s824 = scalar_lea.vmem %s8, %s823
      $region68: #{tpu_custom_call.1} parent=63 // pred_fallthru
        _
      // Predicated region
      $region69: #{tpu_custom_call.1} parent=63 // pred_check
        %p825 = pneg %p283
      $region70: #{tpu_custom_call.1} parent=63 // pred_check_branch
        %827 = sbr.rel (%p825) target = $region72
      $region71: #{tpu_custom_call.1} parent=63 // pred_region
        %s828 = smul.u32 2, %s28
        %p829 = scmp.lt.s32.totalorder %s27, 1
        %s830 = scalar_select %p829, %s27, 1
        %p831 = scmp.lt.s32.totalorder %s828, 3
        %s832 = scalar_select %p831, %s828, 3
        %s833 = smul.addr %s830, 4
        %s834 = sadd.s32 %s832, %s833
        %s835 = smul.addr %s834, 8
        %s836 = scalar_lea.vmem %s9, %s835
      $region72: #{tpu_custom_call.1} parent=63 // pred_fallthru
        _
    $region64: #{tpu_custom_call.1} parent=5 // pred_fallthru
      _
  $region6: #{tpu_custom_call.1} parent=0 // loop_footer
    %s20 = sadd.s32 1, %s16
  $region7: #{tpu_custom_call.1} parent=0 // loop_footer_branch
    %15 = sbr.rel target = $region3
  $region8: #{tpu_custom_call.1} parent=0 // loop_exit
    _

</llo_original>
